<compile_context>
chip_gen: v7x
topology: tpu7x:2x2x1
jax: 0.10.0
libtpu: 0.0.40
codegen_flags: <defaults>
</compile_context>

<pallas_src>
import numpy as np
import jax
import jax.numpy as jnp
from jax.experimental import pallas as pl
from jax.experimental.pallas import tpu as pltpu

GLOBAL_TEMPERATURE = 5.0          # Q_j_soft_single default temperature (forward path)
HALF_TEMP = 0.5 * GLOBAL_TEMPERATURE
LANE = 128
ROWS_PER_BLOCK = 2048             # ~6.5 MiB double-buffered; fits v5e/v6e/v7x defaults
MIN_GRID_STEPS = 2                # keep >=2 grid steps when splittable (v7x 2-TC + pipelining)

TRUE_PARAMS = np.array(
    [0.285311, 0.384, 0.151, 0.017, 0.008, 55.0, 8.0, 5.0, 0.6, 2.0],
    dtype=np.float32,
)


# ----------------------------------------------------------------------------
# Kernel
# ----------------------------------------------------------------------------
def covid_soft_kernel(params_ref, tau_ref, a_ref, c_ref, out_ref):
    """1 - exp(-mu * r_n_soft(params, events, T)) for one (rows, 128) tile."""
    # params layout (pre-derived in wrapper):
    #   [mu, w_ble0..3, 0.5*T*t0_abs, 0.5*T*t1_abs, 0.5*T*t2_abs, w_con(c==2), w_con(c==3)]
    mu = params_ref[0]
    w_b0 = params_ref[1]
    w_b1 = params_ref[2]
    w_b2 = params_ref[3]
    w_b3 = params_ref[4]
    ht0 = params_ref[5]
    ht1 = params_ref[6]
    ht2 = params_ref[7]
    wc2 = params_ref[8]
    wc3 = params_ref[9]

    tau = tau_ref[...]
    ha = HALF_TEMP * a_ref[...]          # one vector mul per tile (temp folded elsewhere)
    cf = c_ref[...].astype(jnp.float32)  # int8 {1..4} -> f32 for the comparisons

    # sigmoid(x, T) = 0.5 + 0.5*tanh(0.5*T*x): a single EUP tanh per sigmoid,
    # numerically saturates cleanly (no exp overflow, no approx reciprocal).
    p0 = 0.5 + 0.5 * jnp.tanh(ht0 - ha)
    p1 = 0.5 + 0.5 * jnp.tanh(ht1 - ha)
    p2 = 0.5 + 0.5 * jnp.tanh(ht2 - ha)

    # Soft BLE buckets with the complement identity sig(a-t) == 1 - sig(t-a).
    score = tau * (p0 * w_b0
                   + (1.0 - p0) * p1 * w_b1
                   + (1.0 - p1) * p2 * w_b2
                   + (1.0 - p2) * w_b3)

    # f_con: weight_con[0] where c==2, weight_con[1] where c==3, else 0.
    f_con = (wc2 * (cf == 2.0).astype(jnp.float32)
             + wc3 * (cf == 3.0).astype(jnp.float32))

    # Q_j_soft_single: 1 - exp(-mu * r_n)
    out_ref[...] = (1.0 - jnp.exp(-mu * (score * f_con))).astype(out_ref.dtype)


# ----------------------------------------------------------------------------
# Wrapper
# ----------------------------------------------------------------------------
def _choose_tiling(n_rows, block_rows, min_steps=MIN_GRID_STEPS):
    """Pick (rows_per_block, padded_rows).

    Either a single full-array block (tiny inputs: the 'block == full dims'
    exception covers the (8,128)/(32,128) rules), or a block whose row count is
    a multiple of 32 (int8 sublane tiling) chosen so the grid has >= min_steps
    steps, capped at block_rows.
    """
    if n_rows <= 32:
        return n_rows, n_rows
    r = 32 * (-(-n_rows // (32 * min_steps)))   # ceil to multiple of 32, >= min_steps steps
    r = max(32, min(block_rows, r))
    if r >= n_rows:
        return n_rows, n_rows
    n_rows_pad = -(-n_rows // r) * r
    return r, n_rows_pad


def prepare_events(events, *, block_rows=ROWS_PER_BLOCK, min_steps=MIN_GRID_STEPS):
    """One-time AoS (N,3) f32 -> lane-dense SoA layout (tau/a f32, c int8).

    Hoist this out of a parameter-fitting loop: the events are static there, so
    the layout pass (the only extra HBM traffic) is paid once, not per forward.
    """
    events = jnp.asarray(events, jnp.float32)
    n = events.shape[0]
    n_rows = -(-n // LANE)                       # ceil(N / 128)
    r, n_rows_pad = _choose_tiling(n_rows, block_rows, min_steps)
    pad = n_rows_pad * LANE - n

    def to2d(col, dtype):
        return jnp.pad(col.astype(dtype), (0, pad)).reshape(n_rows_pad, LANE)

    return {
        "tau": to2d(events[:, 0], jnp.float32),
        "a": to2d(events[:, 1], jnp.float32),
        "c": to2d(events[:, 2], jnp.int8),       # {1..4} exact; 4x less HBM than f32
        "n": n,
        "rows_per_block": r,
        "n_rows_pad": n_rows_pad,
    }


def covid_soft_forward(params, prepared, *, out_dtype=jnp.float32):
    """Forward pass on pre-laid-out events (use inside a fitting loop)."""
    params = jnp.asarray(params, jnp.float32)

    # Derive absolute thresholds once and fold 0.5*temperature into them.
    t0 = params[5]
    t1 = t0 + params[6]
    t2 = t1 + params[7]
    derived = jnp.concatenate([
        params[0:5],                             # mu, w_ble0..3
        HALF_TEMP * jnp.stack([t0, t1, t2]),     # 0.5*T * absolute thresholds
        params[8:10],                            # w_con
    ])

    tau2, a2, c2 = prepared["tau"], prepared["a"], prepared["c"]
    n = prepared["n"]
    r = prepared["rows_per_block"]
    n_rows_pad = prepared["n_rows_pad"]
    grid = (n_rows_pad // r,)
    n_pad = n_rows_pad * LANE
    out_bytes = jnp.dtype(out_dtype).itemsize

    out = pl.pallas_call(
        covid_soft_kernel,
        out_shape=jax.ShapeDtypeStruct((n_rows_pad, LANE), out_dtype),
        grid_spec=pltpu.PrefetchScalarGridSpec(
            num_scalar_prefetch=1,               # derived params -> SMEM
            grid=grid,
            in_specs=[pl.BlockSpec((r, LANE), lambda i, p: (i, 0)),   # tau
                      pl.BlockSpec((r, LANE), lambda i, p: (i, 0)),   # a
                      pl.BlockSpec((r, LANE), lambda i, p: (i, 0))],  # c (int8)
            out_specs=pl.BlockSpec((r, LANE), lambda i, p: (i, 0)),
        ),
        compiler_params=pltpu.CompilerParams(dimension_semantics=("parallel",)),
        cost_estimate=pl.CostEstimate(
            flops=30 * n_pad,                    # adds/muls/compares per element
            transcendentals=4 * n_pad,           # 3 tanh + 1 exp per element
            bytes_accessed=(4 + 4 + 1 + out_bytes) * n_pad,
        ),
    )(derived, tau2, a2, c2)

    return out.reshape(-1)[:n]


def covid_soft_model(params, events, *, block_rows=ROWS_PER_BLOCK, out_dtype=jnp.float32):
    """Convenience path: Pallas equivalent of CovidSoftModel.forward(events)."""
    return covid_soft_forward(params, prepare_events(events, block_rows=block_rows),
                              out_dtype=out_dtype)


# ----------------------------------------------------------------------------
# Pure-JAX reference (matches the PyTorch Q_j_soft_single semantics)
# ----------------------------------------------------------------------------
def covid_soft_reference(params, events):
    params = jnp.asarray(params, jnp.float32)
    events = jnp.asarray(events, jnp.float32)
    tau, a, c = events[:, 0], events[:, 1], events[:, 2]
    temp = GLOBAL_TEMPERATURE
    sig = lambda x: 1.0 / (1.0 + jnp.exp(-temp * x))

    mu = params[0]
    w_ble = params[1:5]
    t0 = params[5]
    t1 = t0 + params[6]
    t2 = t1 + params[7]
    wc = params[8:10]

    s0 = tau * sig(t0 - a)
    s1 = tau * sig(a - t0) * sig(t1 - a)
    s2 = tau * sig(a - t1) * sig(t2 - a)
    s3 = tau * sig(a - t2)
    score = s0 * w_ble[0] + s1 * w_ble[1] + s2 * w_ble[2] + s3 * w_ble[3]
    f_con = jnp.where(c == 2.0, wc[0], jnp.where(c == 3.0, wc[1], 0.0))
    return 1.0 - jnp.exp(-mu * score * f_con)


def _make_inputs(key, n):
    k_tau, k_a, k_c = jax.random.split(key, 3)
    tau = jax.random.uniform(k_tau, (n,), jnp.float32, 5.0, 30.0)
    a = jax.random.uniform(k_a, (n,), jnp.float32, 40.0, 80.0)
    c = jax.random.randint(k_c, (n,), 1, 5).astype(jnp.float32)  # values in {1,2,3,4}
    return jnp.stack([tau, a, c], axis=1)


if __name__ == "__main__":
    key = jax.random.PRNGKey(0)
    k_noise, k_noise2, k_small, k_big = jax.random.split(key, 4)

    # Deterministic parameter init mimicking true_params + |N(0, 0.1)|
    params = jnp.asarray(TRUE_PARAMS) + jnp.abs(
        jax.random.normal(k_noise, (10,), jnp.float32)) * 0.1
    params2 = jnp.asarray(TRUE_PARAMS) + jnp.abs(
        jax.random.normal(k_noise2, (10,), jnp.float32)) * 0.1

    # tanh-based sigmoids are exact (no approx reciprocal), so tolerances tighten.
    RTOL, ATOL = 5e-4, 1e-6

    # Test 1: tiny batch -> single full-array block (full-dim exception path).
    events_small = _make_inputs(k_small, 200)
    out_small = jax.block_until_ready(covid_soft_model(params, events_small))
    np.testing.assert_allclose(np.asarray(out_small),
                               np.asarray(covid_soft_reference(params, events_small)),
                               rtol=RTOL, atol=ATOL)

    # Test 2: larger batch; layout prepared ONCE and reused for two parameter
    # vectors (the fitting-loop pattern).  Exercises the multi-step grid
    # (>=2 steps, 32-row-multiple blocks) and row padding.
    events_big = _make_inputs(k_big, 10000)
    prepared = prepare_events(events_big)            # hoisted AoS->SoA transform
    assert prepared["n_rows_pad"] // prepared["rows_per_block"] >= MIN_GRID_STEPS
    for p in (params, params2):
        out_big = jax.block_until_ready(covid_soft_forward(p, prepared))
        np.testing.assert_allclose(np.asarray(out_big),
                                   np.asarray(covid_soft_reference(p, events_big)),
                                   rtol=RTOL, atol=ATOL)

    print("KERNEL_OK")
</pallas_src>

<mosaic_0001>
module attributes {stable_mosaic.version = 11 : i64} {
  func.func @covid_soft_kernel(%arg0: i32, %arg1: memref<10xf32, #tpu.memory_space<smem>>, %arg2: memref<2x128xf32, #tpu.memory_space<vmem>>, %arg3: memref<2x128xf32, #tpu.memory_space<vmem>>, %arg4: memref<2x128xi8, #tpu.memory_space<vmem>>, %arg5: memref<2x128xf32, #tpu.memory_space<vmem>>) attributes {dimension_semantics = [#tpu.dimension_semantics<parallel>], iteration_bounds = array<i64: 1>, scalar_prefetch = 1 : i64, scratch_operands = 0 : i64, tpu.core_type = #tpu.core_type<tc>, window_params = [{transform_indices = @transform_0, window_bounds = array<i64: 2, 128>}, {transform_indices = @transform_1, window_bounds = array<i64: 2, 128>}, {transform_indices = @transform_2, window_bounds = array<i64: 2, 128>}, {transform_indices = @transform_3, window_bounds = array<i64: 2, 128>}]} {
    %c0 = arith.constant 0 : index
    %0 = memref.load %arg1[%c0] : memref<10xf32, #tpu.memory_space<smem>>
    %c1 = arith.constant 1 : index
    %1 = memref.load %arg1[%c1] : memref<10xf32, #tpu.memory_space<smem>>
    %c2 = arith.constant 2 : index
    %2 = memref.load %arg1[%c2] : memref<10xf32, #tpu.memory_space<smem>>
    %c3 = arith.constant 3 : index
    %3 = memref.load %arg1[%c3] : memref<10xf32, #tpu.memory_space<smem>>
    %c4 = arith.constant 4 : index
    %4 = memref.load %arg1[%c4] : memref<10xf32, #tpu.memory_space<smem>>
    %c5 = arith.constant 5 : index
    %5 = memref.load %arg1[%c5] : memref<10xf32, #tpu.memory_space<smem>>
    %c6 = arith.constant 6 : index
    %6 = memref.load %arg1[%c6] : memref<10xf32, #tpu.memory_space<smem>>
    %c7 = arith.constant 7 : index
    %7 = memref.load %arg1[%c7] : memref<10xf32, #tpu.memory_space<smem>>
    %c8 = arith.constant 8 : index
    %8 = memref.load %arg1[%c8] : memref<10xf32, #tpu.memory_space<smem>>
    %c9 = arith.constant 9 : index
    %9 = memref.load %arg1[%c9] : memref<10xf32, #tpu.memory_space<smem>>
    %c0_0 = arith.constant 0 : index
    %c0_1 = arith.constant 0 : index
    %10 = vector.load %arg2[%c0_0, %c0_1] : memref<2x128xf32, #tpu.memory_space<vmem>>, vector<2x128xf32>
    %c0_2 = arith.constant 0 : index
    %c0_3 = arith.constant 0 : index
    %11 = vector.load %arg3[%c0_2, %c0_3] : memref<2x128xf32, #tpu.memory_space<vmem>>, vector<2x128xf32>
    %cst = arith.constant 2.500000e+00 : f32
    %12 = vector.broadcast %cst : f32 to vector<2x128xf32>
    %13 = arith.mulf %12, %11 : vector<2x128xf32>
    %c0_4 = arith.constant 0 : index
    %c0_5 = arith.constant 0 : index
    %14 = vector.load %arg4[%c0_4, %c0_5] : memref<2x128xi8, #tpu.memory_space<vmem>>, vector<2x128xi8>
    %15 = arith.sitofp %14 : vector<2x128xi8> to vector<2x128xf32>
    %16 = vector.broadcast %5 : f32 to vector<2x128xf32>
    %17 = arith.subf %16, %13 : vector<2x128xf32>
    %18 = math.tanh %17 : vector<2x128xf32>
    %cst_6 = arith.constant 5.000000e-01 : f32
    %19 = vector.broadcast %cst_6 : f32 to vector<2x128xf32>
    %20 = arith.mulf %19, %18 : vector<2x128xf32>
    %cst_7 = arith.constant 5.000000e-01 : f32
    %21 = vector.broadcast %cst_7 : f32 to vector<2x128xf32>
    %22 = arith.addf %21, %20 : vector<2x128xf32>
    %23 = vector.broadcast %6 : f32 to vector<2x128xf32>
    %24 = arith.subf %23, %13 : vector<2x128xf32>
    %25 = math.tanh %24 : vector<2x128xf32>
    %cst_8 = arith.constant 5.000000e-01 : f32
    %26 = vector.broadcast %cst_8 : f32 to vector<2x128xf32>
    %27 = arith.mulf %26, %25 : vector<2x128xf32>
    %cst_9 = arith.constant 5.000000e-01 : f32
    %28 = vector.broadcast %cst_9 : f32 to vector<2x128xf32>
    %29 = arith.addf %28, %27 : vector<2x128xf32>
    %30 = vector.broadcast %7 : f32 to vector<2x128xf32>
    %31 = arith.subf %30, %13 : vector<2x128xf32>
    %32 = math.tanh %31 : vector<2x128xf32>
    %cst_10 = arith.constant 5.000000e-01 : f32
    %33 = vector.broadcast %cst_10 : f32 to vector<2x128xf32>
    %34 = arith.mulf %33, %32 : vector<2x128xf32>
    %cst_11 = arith.constant 5.000000e-01 : f32
    %35 = vector.broadcast %cst_11 : f32 to vector<2x128xf32>
    %36 = arith.addf %35, %34 : vector<2x128xf32>
    %37 = vector.broadcast %1 : f32 to vector<2x128xf32>
    %38 = arith.mulf %22, %37 : vector<2x128xf32>
    %cst_12 = arith.constant 1.000000e+00 : f32
    %39 = vector.broadcast %cst_12 : f32 to vector<2x128xf32>
    %40 = arith.subf %39, %22 : vector<2x128xf32>
    %41 = arith.mulf %40, %29 : vector<2x128xf32>
    %42 = vector.broadcast %2 : f32 to vector<2x128xf32>
    %43 = arith.mulf %41, %42 : vector<2x128xf32>
    %44 = arith.addf %38, %43 : vector<2x128xf32>
    %cst_13 = arith.constant 1.000000e+00 : f32
    %45 = vector.broadcast %cst_13 : f32 to vector<2x128xf32>
    %46 = arith.subf %45, %29 : vector<2x128xf32>
    %47 = arith.mulf %46, %36 : vector<2x128xf32>
    %48 = vector.broadcast %3 : f32 to vector<2x128xf32>
    %49 = arith.mulf %47, %48 : vector<2x128xf32>
    %50 = arith.addf %44, %49 : vector<2x128xf32>
    %cst_14 = arith.constant 1.000000e+00 : f32
    %51 = vector.broadcast %cst_14 : f32 to vector<2x128xf32>
    %52 = arith.subf %51, %36 : vector<2x128xf32>
    %53 = vector.broadcast %4 : f32 to vector<2x128xf32>
    %54 = arith.mulf %52, %53 : vector<2x128xf32>
    %55 = arith.addf %50, %54 : vector<2x128xf32>
    %56 = arith.mulf %10, %55 : vector<2x128xf32>
    %cst_15 = arith.constant 2.000000e+00 : f32
    %57 = vector.broadcast %cst_15 : f32 to vector<2x128xf32>
    %58 = arith.cmpf oeq, %15, %57 : vector<2x128xf32>
    %59 = arith.extui %58 : vector<2x128xi1> to vector<2x128xi32>
    %60 = arith.sitofp %59 : vector<2x128xi32> to vector<2x128xf32>
    %61 = vector.broadcast %8 : f32 to vector<2x128xf32>
    %62 = arith.mulf %61, %60 : vector<2x128xf32>
    %cst_16 = arith.constant 3.000000e+00 : f32
    %63 = vector.broadcast %cst_16 : f32 to vector<2x128xf32>
    %64 = arith.cmpf oeq, %15, %63 : vector<2x128xf32>
    %65 = arith.extui %64 : vector<2x128xi1> to vector<2x128xi32>
    %66 = arith.sitofp %65 : vector<2x128xi32> to vector<2x128xf32>
    %67 = vector.broadcast %9 : f32 to vector<2x128xf32>
    %68 = arith.mulf %67, %66 : vector<2x128xf32>
    %69 = arith.addf %62, %68 : vector<2x128xf32>
    %cst_17 = arith.constant 0.000000e+00 : f32
    %70 = arith.subf %cst_17, %0 : f32
    %71 = arith.mulf %56, %69 : vector<2x128xf32>
    %72 = vector.broadcast %70 : f32 to vector<2x128xf32>
    %73 = arith.mulf %72, %71 : vector<2x128xf32>
    %74 = math.exp %73 : vector<2x128xf32>
    %cst_18 = arith.constant 1.000000e+00 : f32
    %75 = vector.broadcast %cst_18 : f32 to vector<2x128xf32>
    %76 = arith.subf %75, %74 : vector<2x128xf32>
    %c0_19 = arith.constant 0 : index
    %c0_20 = arith.constant 0 : index
    %77 = vector.load %arg5[%c0_19, %c0_20] : memref<2x128xf32, #tpu.memory_space<vmem>>, vector<2x128xf32>
    tpu.vector_store %arg5[%c0_19, %c0_20], %76 {strides = array<i32>} : memref<2x128xf32, #tpu.memory_space<vmem>>, vector<2x128xf32>,
    return
  }
  func.func @transform_0(%arg0: i32, %arg1: memref<10xf32, #tpu.memory_space<smem>>) -> (i32, i32) {
    %c0_i32 = arith.constant 0 : i32
    %c0_i32_0 = arith.constant 0 : i32
    return %arg0, %c0_i32 : i32, i32
  }
  func.func @transform_1(%arg0: i32, %arg1: memref<10xf32, #tpu.memory_space<smem>>) -> (i32, i32) {
    %c0_i32 = arith.constant 0 : i32
    %c0_i32_0 = arith.constant 0 : i32
    return %arg0, %c0_i32 : i32, i32
  }
  func.func @transform_2(%arg0: i32, %arg1: memref<10xf32, #tpu.memory_space<smem>>) -> (i32, i32) {
    %c0_i32 = arith.constant 0 : i32
    %c0_i32_0 = arith.constant 0 : i32
    return %arg0, %c0_i32 : i32, i32
  }
  func.func @transform_3(%arg0: i32, %arg1: memref<10xf32, #tpu.memory_space<smem>>) -> (i32, i32) {
    %c0_i32 = arith.constant 0 : i32
    %c0_i32_0 = arith.constant 0 : i32
    return %arg0, %c0_i32 : i32, i32
  }
}

</mosaic_0001>

<llo_original>
// kernel: tpu_custom_call.1
$region0: #{tpu_custom_call.1}
  #allocation0 [shape = 'u32[]', space=smem, size = 0x4, offset = 0x4, fixed_abs, tag = 'smem constant byte address 0x4 - core index']
  #allocation1 [shape = 'u32[144,128]{1,0:T(1,128)}', space=vmem, size = 0x12000, scoped, tag = 'internal scratch']
  #allocation2 [shape = 's32[1]{0}', space=sflag, size = 0x4, scoped, tag = 'scoped memory for tpu_custom_call.1']
  #allocation3 [shape = 'u8[512]{0}', space=smem, size = 0x200, scoped, tag = 'prefetched SMEM operand 0']
  %s0 = inlined_call_operand.hbm [shape: f32[10], index: 0, kind: input, shape index: {}]
  %s1 = inlined_call_operand.vmem [shape: f32[2,128], index: 1, kind: input, shape index: {}]
  %s2 = inlined_call_operand.vmem [shape: f32[2,128], index: 2, kind: input, shape index: {}]
  %s3 = inlined_call_operand.vmem [shape: s8[2,128], index: 3, kind: input, shape index: {}]
  %s4 = inlined_call_operand.hbm [shape: f32[2,128], index: 4, kind: output, shape index: {}]
  %s5 = sld [smem:[#allocation0]]
  $region22: #{tpu_custom_call.1} parent=0
    _
  %s7 = ssub.s32 1, %s5
  %s8 = scalar_select 0, %s7, %s5
  %10 = dma.hbm_to_smem %s0, 16, [#allocation3], [#allocation2]
  %11 = dma.done [#allocation2], 16
  %12 = sfence
  $region1: #{tpu_custom_call.1} parent=0
    #allocation4 [shape = 'u8[1024]{0}', space=vmem, size = 0x400, scoped, tag = 'output window, operand 0, single buffered']
    #allocation5 [shape = 's32[1]{0}', space=sflag, size = 0x4, scoped, tag = 'scoped memory for tpu_custom_call.1']
    %13 = vsyncpa [#allocation5], 0
    // Predicated region
    $region2: #{tpu_custom_call.1} parent=1 // pred_check
      _
    $region3: #{tpu_custom_call.1} parent=1 // pred_check_branch
      %15 = sbr.rel (0) target = $region5
    $region4: #{tpu_custom_call.1} parent=1 // pred_region
      _
    $region5: #{tpu_custom_call.1} parent=1 // pred_fallthru
      _
    // Predicated region
    $region6: #{tpu_custom_call.1} parent=1 // pred_check
      _
    $region7: #{tpu_custom_call.1} parent=1 // pred_check_branch
      %17 = sbr.rel (0) target = $region9
    $region8: #{tpu_custom_call.1} parent=1 // pred_region
      _
    $region9: #{tpu_custom_call.1} parent=1 // pred_fallthru
      _
    // Predicated region
    $region10: #{tpu_custom_call.1} parent=1 // pred_check
      _
    $region11: #{tpu_custom_call.1} parent=1 // pred_check_branch
      %19 = sbr.rel (0) target = $region13
    $region12: #{tpu_custom_call.1} parent=1 // pred_region
      _
    $region13: #{tpu_custom_call.1} parent=1 // pred_fallthru
      _
    %s20 = sld [smem:[#allocation3]]
    %s21 = sld [smem:[#allocation3 + $0x1]]
    %s22 = sld [smem:[#allocation3 + $0x2]]
    %s23 = sld [smem:[#allocation3 + $0x3]]
    %s24 = sld [smem:[#allocation3 + $0x4]]
    %s25 = sld [smem:[#allocation3 + $0x5]]
    %s26 = sld [smem:[#allocation3 + $0x6]]
    %s27 = sld [smem:[#allocation3 + $0x7]]
    %s28 = sld [smem:[#allocation3 + $0x8]]
    %s29 = sld [smem:[#allocation3 + $0x9]]
    %v30 = vld [vmem:[%s1] sm:$0x3]
    %v31 = vld [vmem:[%s2] sm:$0x3]
    %v32 = vmul.f32 %v31, 2.5
    %v33 = vld [vmem:[%s3] sm:$0x1]
    %v34 = vunpack.c.0.s8 %v33
    %v35 = vcvt.s32.f32 %v34
    %v36 = vstv %s25
    %v37 = vsub.f32 %v36, %v32
    %v38 = vtanh.pop %v37
    %v39 = vmul.f32 %v38, 0.5
    %v40 = vadd.f32 %v39, 0.5
    %v41 = vstv %s26
    %v42 = vsub.f32 %v41, %v32
    %v43 = vtanh.pop %v42
    %v44 = vmul.f32 %v43, 0.5
    %v45 = vadd.f32 %v44, 0.5
    %v46 = vstv %s27
    %v47 = vsub.f32 %v46, %v32
    %v48 = vtanh.pop %v47
    %v49 = vmul.f32 %v48, 0.5
    %v50 = vadd.f32 %v49, 0.5
    %v51 = vstv %s21
    %v52 = vmul.f32 %v40, %v51
    %v53 = vsub.f32 1.0, %v40
    %v54 = vmul.f32 %v53, %v45
    %v55 = vstv %s22
    %v56 = vmul.f32 %v54, %v55
    %v57 = vadd.f32 %v52, %v56
    %v58 = vsub.f32 1.0, %v45
    %v59 = vmul.f32 %v58, %v50
    %v60 = vstv %s23
    %v61 = vmul.f32 %v59, %v60
    %v62 = vadd.f32 %v57, %v61
    %v63 = vsub.f32 1.0, %v50
    %v64 = vstv %s24
    %v65 = vmul.f32 %v63, %v64
    %v66 = vadd.f32 %v62, %v65
    %v67 = vmul.f32 %v30, %v66
    %vm68 = vcmp.eq.f32.partialorder %v35, 2.0
    %v69 = vsel %vm68, 1, 0
    %v70 = vcvt.s32.f32 %v69
    %v71 = vstv %s28
    %v72 = vmul.f32 %v71, %v70
    %vm73 = vcmp.eq.f32.partialorder %v35, 3.0
    %v74 = vsel %vm73, 1, 0
    %v75 = vcvt.s32.f32 %v74
    %v76 = vstv %s29
    %v77 = vmul.f32 %v76, %v75
    %v78 = vadd.f32 %v72, %v77
    %s79 = ssub.f32 0.0, %s20
    %v80 = vmul.f32 %v67, %v78
    %v81 = vstv %s79
    %v82 = vmul.f32 %v81, %v80
    %v83 = vmul.f32 %v82, 1.442695
    %v84 = vpow.pop %v83
    %v85 = vsub.f32 1.0, %v84
    %86 = vst [vmem:[#allocation4] sm:$0x3] %v85
    // Predicated region
    $region14: #{tpu_custom_call.1} parent=1 // pred_check
      _
    $region15: #{tpu_custom_call.1} parent=1 // pred_check_branch
      %88 = sbr.rel (0) target = $region17
    $region16: #{tpu_custom_call.1} parent=1 // pred_region
      %s90 = ssub.s32 32, 32
      %91 = vsyncadd [#allocation5], %s90
      %s93 = sshll.u32 [#allocation4], 4
      %s94 = int_to_ptr.vmem [resolvable:$true] %s93
      %96 = dma.vmem_to_hbm [thread:$0]  %s94, 32, %s4, [#allocation5]
    $region17: #{tpu_custom_call.1} parent=1 // pred_fallthru
      _
    // Predicated region
    $region18: #{tpu_custom_call.1} parent=1 // pred_check
      _
    $region19: #{tpu_custom_call.1} parent=1 // pred_check_branch
      %98 = sbr.rel (0) target = $region21
    $region20: #{tpu_custom_call.1} parent=1 // pred_region
      %99 = dma.done [#allocation5], 32
    $region21: #{tpu_custom_call.1} parent=1 // pred_fallthru
      _
    %100 = vsyncpa [#allocation5], 1

</llo_original>
